<compile_context>
chip_gen: v5e
topology: v5e:2x2
jax: 0.10.0
libtpu: 0.0.40
codegen_flags: <defaults>
</compile_context>

<pallas_src>
import functools

import jax
import jax.numpy as jnp
import numpy as np
from jax import lax
from jax.experimental import pallas as pl
from jax.experimental.pallas import tpu as pltpu


def _round_up(x, m):
    return ((x + m - 1) // m) * m


def _fused_kernel(x_ref, w_ref, shift_ref, o_ref, *, nb, K, S, Wp, Lw_pad, Cin_pad):
    """Fused pointwise + depthwise + BN + ReLU for one block of `nb` images.

    x_ref:     (nb, Cin_pad, Lin)     zero-padded images, spatial flattened on lanes
    w_ref:     (Cout, K*K*Cin_pad)    combined pointwise*depthwise*BN-scale weight
    shift_ref: (Cout, 1)              folded depthwise-bias + BN shift (f32)
    o_ref:     (nb, Cout, Lw_pad)     "wide" NCHW-flat output, lane-dense (128-multiple)
    """
    w = w_ref[...]                                 # keep compute dtype (bf16/f32)
    shift = shift_ref[...].astype(jnp.float32)     # (Cout, 1) -> lane broadcast

    def body(b, carry):
        x = x_ref[b]                               # (Cin_pad, Lin)
        taps = []
        for kh in range(K):
            for kw in range(K):
                off = kh * Wp + kw                 # static lane offset of this tap
                if S == 1:
                    taps.append(lax.slice(x, (0, off), (Cin_pad, off + Lw_pad)))
                else:
                    # TODO(synk): stride>1 computes Wp-wide rows via strided lane
                    # slices (XLU gathers); restructure per output row for
                    # production stride>1 shapes.
                    taps.append(lax.slice(x, (0, off),
                                          (Cin_pad, off + S * (Lw_pad - 1) + 1),
                                          (1, S)))
        # In-kernel im2col: sublane-tile-aligned pieces -> cheap concat.
        col = jnp.concatenate(taps, axis=0)        # (K*K*Cin_pad, Lw_pad)
        # Single MXU matmul, contraction depth K*K*Cin_pad, f32 accumulation.
        acc = jnp.dot(w, col, preferred_element_type=jnp.float32)
        o_ref[b] = jnp.maximum(acc + shift, 0.0).astype(o_ref.dtype)
        return carry

    if nb == 1:
        body(0, 0)
    else:
        # Bounded live ranges for multi-image blocks (no nb concurrent accumulators).
        lax.fori_loop(0, nb, body, 0, unroll=True)


def bsep_conv_bn_relu(x_nchw, w_pw, w_dw, dw_bias, bn_gamma, bn_beta,
                      bn_mean, bn_var, *, kernel_size, stride, padding,
                      eps=1e-5, batch_block=1, compute_dtype=jnp.bfloat16):
    """Pallas implementation of BSepConvBNReLU.forward (eval-mode BN).

    x_nchw : (N, Cin, H, W)     float32
    w_pw   : (Cout, Cin, 1, 1)  pointwise conv weight (PyTorch layout)
    w_dw   : (Cout, 1, K, K)    depthwise conv weight (PyTorch layout)
    dw_bias: (Cout,)
    bn_*   : (Cout,)
    returns: (N, Cout, Ho, Wo)  float32
    """
    N, Cin, H, W = x_nchw.shape
    Cout = w_pw.shape[0]
    K, S, P = kernel_size, stride, padding
    Ho = (H + 2 * P - K) // S + 1
    Wo = (W + 2 * P - K) // S + 1
    Hp, Wp = H + 2 * P, W + 2 * P

    # Lane-dense wide output: Ho*Wp rounded up to a 128 multiple (unmasked vst).
    Lw = Ho * Wp
    Lw_pad = _round_up(Lw, 128)

    # Sublane-aligned channel padding: 8 rows per vreg tile for f32, 16 for bf16.
    itemsize = jnp.dtype(compute_dtype).itemsize
    sub = 8 * (4 // itemsize)
    Cin_pad = _round_up(Cin, sub)
    KC = K * K * Cin_pad

    # Flat padded-input length the largest tap slice can touch, lane-tile rounded.
    Lin = max(Hp * Wp, (K - 1) * (Wp + 1) + S * (Lw_pad - 1) + 1)
    Lin = _round_up(Lin, 128)

    nb = batch_block                                # images per grid step
    assert N % nb == 0, "batch_block must divide the batch size"
    # NOTE: keep N // nb >= 2 so v7x's two TensorCores both get grid steps.

    # ---- wrapper-side layout plumbing (cheap XLA ops, no transposes) ----
    xp = jnp.pad(x_nchw, ((0, 0), (0, Cin_pad - Cin), (P, P), (P, P)))
    xflat = xp.reshape(N, Cin_pad, Hp * Wp)
    xflat = jnp.pad(xflat, ((0, 0), (0, 0), (0, Lin - Hp * Wp)))
    xflat = xflat.astype(compute_dtype)             # bf16 operands by default

    # ---- fold BatchNorm (eval) + depthwise bias into the conv weights ----
    scale = bn_gamma / jnp.sqrt(bn_var + eps)                       # (Cout,)
    shift = bn_beta - bn_mean * scale + dw_bias * scale             # (Cout,)
    w_pw2 = w_pw[:, :, 0, 0]                                        # (Cout, Cin)
    w_dw2 = w_dw[:, 0, :, :].reshape(Cout, K * K) * scale[:, None]  # (Cout, K*K)
    # w_comb[co, kh*K+kw, ci] = w_dw[co,kh,kw] * scale[co] * w_pw[co,ci]
    w_comb = w_dw2[:, :, None] * w_pw2[:, None, :]                  # (Cout, K*K, Cin)
    w_comb = jnp.pad(w_comb, ((0, 0), (0, 0), (0, Cin_pad - Cin)))
    w2 = w_comb.reshape(Cout, KC).astype(compute_dtype)
    # TODO(synk): at large Cin, don't fold the pointwise conv into every tap
    # (K^2x extra MXU FLOPs); do one (Cout,Cin) pointwise matmul per lane tile
    # and apply the K*K depthwise taps as VPU FMAs on its lane-shifted slices.
    shift2d = shift.reshape(Cout, 1).astype(jnp.float32)

    kernel = functools.partial(_fused_kernel, nb=nb, K=K, S=S, Wp=Wp,
                               Lw_pad=Lw_pad, Cin_pad=Cin_pad)

    # Explicit scoped-VMEM limit (v5e default is only 16 MiB): double-buffered
    # blocks + headroom, capped well under v7x's 64 MiB physical VMEM.
    blk_bytes = (nb * Cin_pad * Lin * itemsize      # input block
                 + Cout * KC * itemsize             # weight block
                 + Cout * 4                         # shift
                 + nb * Cout * Lw_pad * 4)          # f32 output block
    vmem_limit = int(min(max(4 * blk_bytes + (1 << 20), 16 << 20), 48 << 20))

    out_wide = pl.pallas_call(
        kernel,
        out_shape=jax.ShapeDtypeStruct((N, Cout, Lw_pad), jnp.float32),
        grid_spec=pltpu.PrefetchScalarGridSpec(
            num_scalar_prefetch=0,
            grid=(N // nb,),
            in_specs=[
                pl.BlockSpec((nb, Cin_pad, Lin), lambda n: (n, 0, 0)),
                pl.BlockSpec((Cout, KC), lambda n: (0, 0)),
                pl.BlockSpec((Cout, 1), lambda n: (0, 0)),
            ],
            out_specs=pl.BlockSpec((nb, Cout, Lw_pad), lambda n: (n, 0, 0)),
        ),
        # Batch axis is independent -> "parallel" (v7x shards it over its 2 TCs).
        # TODO(synk): at production sizes (large H*W / Cin / Cout) tile Ho into
        # row chunks with a (K-1)-row input halo and chunk the lane axis so the
        # f32 accumulator stays register-resident; whole-image blocks would
        # exceed VMEM there.
        compiler_params=pltpu.CompilerParams(
            dimension_semantics=("parallel",),
            vmem_limit_bytes=vmem_limit),
    )(xflat, w2, shift2d)

    # Drop the lane padding and the Wp-Wo garbage columns per row.
    # TODO(synk): this crop re-materializes the output once in HBM; at
    # production sizes hand the wide layout to the consumer or store cropped
    # rows directly from the kernel.
    return out_wide[:, :, :Lw].reshape(N, Cout, Ho, Wp)[:, :, :, :Wo]


def _reference(x, w_pw, w_dw, dw_bias, gamma, beta, mean, var,
               *, stride, padding, eps=1e-5):
    """Pure-JAX reference matching the PyTorch module (eval-mode BN)."""
    dn = ("NCHW", "OIHW", "NCHW")
    y = lax.conv_general_dilated(x, w_pw, (1, 1), "VALID",
                                 dimension_numbers=dn)
    y = lax.conv_general_dilated(y, w_dw, (stride, stride),
                                 [(padding, padding), (padding, padding)],
                                 dimension_numbers=dn,
                                 feature_group_count=w_dw.shape[0])
    y = y + dw_bias[None, :, None, None]
    scale = gamma / jnp.sqrt(var + eps)
    shift = beta - mean * scale
    y = y * scale[None, :, None, None] + shift[None, :, None, None]
    return jnp.maximum(y, 0.0)


if __name__ == "__main__":
    # Module config: BSepConvBNReLU(in_channels=4, out_channels=8,
    #                               kernel_size=3, stride=1, padding=1, bias=True)
    N, Cin, H, W = 2, 4, 16, 16
    Cout, K, S, P = 8, 3, 1, 1

    key = jax.random.PRNGKey(0)
    k_x, k_pw, k_dw, k_b = jax.random.split(key, 4)

    x = jax.random.normal(k_x, (N, Cin, H, W), dtype=jnp.float32)
    w_pw = jax.random.normal(k_pw, (Cout, Cin, 1, 1), dtype=jnp.float32) * 0.1
    w_dw = jax.random.normal(k_dw, (Cout, 1, K, K), dtype=jnp.float32) * 0.1
    dw_bias = jax.random.normal(k_b, (Cout,), dtype=jnp.float32) * 0.1

    # BatchNorm2d parameters at their PyTorch defaults (fresh module).
    bn_gamma = jnp.ones((Cout,), jnp.float32)
    bn_beta = jnp.zeros((Cout,), jnp.float32)
    bn_mean = jnp.zeros((Cout,), jnp.float32)
    bn_var = jnp.ones((Cout,), jnp.float32)

    ref = _reference(x, w_pw, w_dw, dw_bias, bn_gamma, bn_beta, bn_mean,
                     bn_var, stride=S, padding=P)

    # 1) f32-operand path: tight check against the f32 reference.
    out_f32 = bsep_conv_bn_relu(x, w_pw, w_dw, dw_bias, bn_gamma, bn_beta,
                                bn_mean, bn_var, kernel_size=K, stride=S,
                                padding=P, compute_dtype=jnp.float32)
    out_f32 = jax.block_until_ready(out_f32)
    np.testing.assert_allclose(np.asarray(out_f32), np.asarray(ref),
                               rtol=1e-4, atol=1e-4)

    # 2) bf16-operand path (default; MXU native rate, f32 accumulation).
    out_bf16 = bsep_conv_bn_relu(x, w_pw, w_dw, dw_bias, bn_gamma, bn_beta,
                                 bn_mean, bn_var, kernel_size=K, stride=S,
                                 padding=P)
    out_bf16 = jax.block_until_ready(out_bf16)
    np.testing.assert_allclose(np.asarray(out_bf16), np.asarray(ref),
                               rtol=2e-2, atol=2e-2)

    # 3) batch_block=2 exercises the bounded fori_loop multi-image path.
    out_blk = bsep_conv_bn_relu(x, w_pw, w_dw, dw_bias, bn_gamma, bn_beta,
                                bn_mean, bn_var, kernel_size=K, stride=S,
                                padding=P, batch_block=2)
    out_blk = jax.block_until_ready(out_blk)
    np.testing.assert_allclose(np.asarray(out_blk), np.asarray(ref),
                               rtol=2e-2, atol=2e-2)

    print("KERNEL_OK")
</pallas_src>

<mosaic_0001>
module attributes {stable_mosaic.version = 11 : i64} {
  func.func @_fused_kernel(%arg0: i32, %arg1: memref<1x8x512xf32, #tpu.memory_space<vmem>>, %arg2: memref<8x72xf32, #tpu.memory_space<vmem>>, %arg3: memref<8x1xf32, #tpu.memory_space<vmem>>, %arg4: memref<1x8x384xf32, #tpu.memory_space<vmem>>) attributes {dimension_semantics = [#tpu.dimension_semantics<parallel>], iteration_bounds = array<i64: 2>, scalar_prefetch = 0 : i64, scratch_operands = 0 : i64, tpu.core_type = #tpu.core_type<tc>, window_params = [{transform_indices = @transform_0, window_bounds = array<i64: 1, 8, 512>}, {pipeline_mode = #tpu.pipeline_mode<synchronous>, transform_indices = @transform_1, window_bounds = array<i64: 8, 72>}, {pipeline_mode = #tpu.pipeline_mode<synchronous>, transform_indices = @transform_2, window_bounds = array<i64: 8, 1>}, {transform_indices = @transform_3, window_bounds = array<i64: 1, 8, 384>}]} {
    %c0 = arith.constant 0 : index
    %c0_0 = arith.constant 0 : index
    %0 = vector.load %arg2[%c0, %c0_0] : memref<8x72xf32, #tpu.memory_space<vmem>>, vector<8x72xf32>
    %c0_1 = arith.constant 0 : index
    %c0_2 = arith.constant 0 : index
    %1 = vector.load %arg3[%c0_1, %c0_2] : memref<8x1xf32, #tpu.memory_space<vmem>>, vector<8x1xf32>
    %c0_3 = arith.constant 0 : index
    %c0_4 = arith.constant 0 : index
    %c0_5 = arith.constant 0 : index
    %2 = vector.load %arg1[%c0_3, %c0_4, %c0_5] : memref<1x8x512xf32, #tpu.memory_space<vmem>>, vector<1x8x512xf32>
    %3 = vector.shape_cast %2 : vector<1x8x512xf32> to vector<8x512xf32>
    %4 = vector.extract_strided_slice %3 {offsets = [0, 0], sizes = [8, 384], strides = [1, 1]} : vector<8x512xf32> to vector<8x384xf32>
    %5 = vector.extract_strided_slice %3 {offsets = [0, 1], sizes = [8, 384], strides = [1, 1]} : vector<8x512xf32> to vector<8x384xf32>
    %6 = vector.extract_strided_slice %3 {offsets = [0, 2], sizes = [8, 384], strides = [1, 1]} : vector<8x512xf32> to vector<8x384xf32>
    %7 = vector.extract_strided_slice %3 {offsets = [0, 18], sizes = [8, 384], strides = [1, 1]} : vector<8x512xf32> to vector<8x384xf32>
    %8 = vector.extract_strided_slice %3 {offsets = [0, 19], sizes = [8, 384], strides = [1, 1]} : vector<8x512xf32> to vector<8x384xf32>
    %9 = vector.extract_strided_slice %3 {offsets = [0, 20], sizes = [8, 384], strides = [1, 1]} : vector<8x512xf32> to vector<8x384xf32>
    %10 = vector.extract_strided_slice %3 {offsets = [0, 36], sizes = [8, 384], strides = [1, 1]} : vector<8x512xf32> to vector<8x384xf32>
    %11 = vector.extract_strided_slice %3 {offsets = [0, 37], sizes = [8, 384], strides = [1, 1]} : vector<8x512xf32> to vector<8x384xf32>
    %12 = vector.extract_strided_slice %3 {offsets = [0, 38], sizes = [8, 384], strides = [1, 1]} : vector<8x512xf32> to vector<8x384xf32>
    %13 = tpu.concatenate %4, %5, %6, %7, %8, %9, %10, %11, %12 in 0 : vector<8x384xf32>, vector<8x384xf32>, vector<8x384xf32>, vector<8x384xf32>, vector<8x384xf32>, vector<8x384xf32>, vector<8x384xf32>, vector<8x384xf32>, vector<8x384xf32> -> vector<72x384xf32>
    %cst = arith.constant dense<0.000000e+00> : vector<8x384xf32>
    %14 = tpu.matmul %0, %13, %cst {dimension_numbers = #tpu.dot_dimension_numbers<[1], [0], [0], [1], [0, 0, 1, 1], [], []>} : vector<8x72xf32>, vector<72x384xf32>, vector<8x384xf32> -> vector<8x384xf32>
    %15 = vector.broadcast %1 : vector<8x1xf32> to vector<8x384xf32>
    %16 = arith.addf %14, %15 : vector<8x384xf32>
    %cst_6 = arith.constant 0.000000e+00 : f32
    %17 = vector.broadcast %cst_6 : f32 to vector<8x384xf32>
    %18 = arith.maximumf %16, %17 : vector<8x384xf32>
    %c0_7 = arith.constant 0 : index
    %c0_8 = arith.constant 0 : index
    %c0_9 = arith.constant 0 : index
    %19 = vector.load %arg4[%c0_7, %c0_8, %c0_9] : memref<1x8x384xf32, #tpu.memory_space<vmem>>, vector<1x8x384xf32>
    %20 = vector.shape_cast %19 : vector<1x8x384xf32> to vector<8x384xf32>
    %21 = vector.shape_cast %18 : vector<8x384xf32> to vector<1x8x384xf32>
    tpu.vector_store %arg4[%c0_7, %c0_8, %c0_9], %21 {strides = array<i32>} : memref<1x8x384xf32, #tpu.memory_space<vmem>>, vector<1x8x384xf32>,
    return
  }
  func.func @transform_0(%arg0: i32) -> (i32, i32, i32) {
    %c0_i32 = arith.constant 0 : i32
    %c0_i32_0 = arith.constant 0 : i32
    %c0_i32_1 = arith.constant 0 : i32
    return %arg0, %c0_i32, %c0_i32_0 : i32, i32, i32
  }
  func.func @transform_1(%arg0: i32) -> (i32, i32) {
    %c0_i32 = arith.constant 0 : i32
    %c0_i32_0 = arith.constant 0 : i32
    %c0_i32_1 = arith.constant 0 : i32
    return %c0_i32, %c0_i32_0 : i32, i32
  }
  func.func @transform_2(%arg0: i32) -> (i32, i32) {
    %c0_i32 = arith.constant 0 : i32
    %c0_i32_0 = arith.constant 0 : i32
    %c0_i32_1 = arith.constant 0 : i32
    return %c0_i32, %c0_i32_0 : i32, i32
  }
  func.func @transform_3(%arg0: i32) -> (i32, i32, i32) {
    %c0_i32 = arith.constant 0 : i32
    %c0_i32_0 = arith.constant 0 : i32
    %c0_i32_1 = arith.constant 0 : i32
    return %arg0, %c0_i32, %c0_i32_0 : i32, i32, i32
  }
}

</mosaic_0001>

<llo_original>
// kernel: tpu_custom_call.1
$region0: #{tpu_custom_call.1}
  #allocation0 [shape = 'u32[]', space=smem, size = 0x4, offset = 0x4, fixed_abs, tag = 'smem constant byte address 0x4 - core index']
  #allocation1 [shape = 'u32[72,128]{1,0:T(1,128)}', space=vmem, size = 0x9000, scoped, tag = 'internal scratch']
  %s0 = inlined_call_operand.hbm [shape: f32[2,8,512], index: 0, kind: input, shape index: {}]
  %s1 = inlined_call_operand.vmem [shape: f32[8,72], index: 1, kind: input, shape index: {}]
  %s2 = inlined_call_operand.vmem [shape: f32[8,1], index: 2, kind: input, shape index: {}]
  %s3 = inlined_call_operand.hbm [shape: f32[2,8,384], index: 3, kind: output, shape index: {}]
  %s4 = sld [smem:[#allocation0]]
  $region49: #{tpu_custom_call.1} parent=0
    _
  %s6 = ssub.s32 1, %s4
  %s7 = scalar_select 0, %s6, %s4
  $region1: #{tpu_custom_call.1} parent=0
    #allocation2 [shape = 'u8[32768]{0}', space=vmem, size = 0x8000, scoped, tag = 'input window, operand 0']
    #allocation3 [shape = 's32[2]{0}', space=sflag, size = 0x8, scoped, tag = 'scoped memory for tpu_custom_call.1']
    #allocation4 [shape = 's32[2]{0}', space=sflag, size = 0x8, scoped, tag = 'scoped memory for tpu_custom_call.1']
    #allocation5 [shape = 'u8[24576]{0}', space=vmem, size = 0x6000, scoped, tag = 'output window, operand 0']
    %8 = vsyncpa [#allocation3], 0
    %s9 = scalar_lea.sflag [#allocation3], 1
    %10 = vsyncpa %s9, 0
    %11 = vsyncpa [#allocation4], 0
    %s12 = scalar_lea.sflag [#allocation4], 1
    %13 = vsyncpa %s12, 0
    loop: start=0, step=1, limit=4
    $region2: #{tpu_custom_call.1} parent=1 // loop_pre_header
      _
    $region3: #{tpu_custom_call.1} parent=1 // loop_header
      %s15 = sphi 0, %s19
      %p16 = scmp.ge.s32.totalorder %s15, 4
      %s25 = sphi 0, %s27
      %s28 = sphi 0, %s25
      %s29 = sphi 0, %s28
      %s45 = sphi 0, %s29
      %s49 = sphi 0, %s49
      %s51 = sphi 0, %s49
      %s52 = sphi 0, %s51
      %s66 = sphi 0, %s52
      %s70 = sphi 0, %s70
      %s72 = sphi 0, %s70
      %s73 = sphi 0, %s72
      %s87 = sphi 0, %s73
      %s93 = sphi 0, %s95
      %s96 = sphi 0, %s93
      %s97 = sphi 0, %s96
      %s113 = sphi 0, %s97
    $region4: #{tpu_custom_call.1} parent=1 // loop_header_branch
      %18 = sbr.rel (%p16) target = $region8
    $region5: #{tpu_custom_call.1} parent=1 // loop_body
      %s20 = ssub.s32 %s15, 1
      %s21 = ssub.s32 %s15, 2
      %s22 = sadd.s32 %s15, 1
      %s23 = ssub.s32 %s15, %s22
      %p24 = scmp.eq.s32.totalorder %s23, 0
      %s26 = sadd.s32 %s25, 1
      %s27 = scalar_select %p24, %s25, %s26
      %p30 = pneg %p24
      %p31 = scmp.eq.s32.totalorder %s15, 1
      %p32 = por %p30, %p31
      %p33 = scmp.ne.s32.totalorder %s25, %s28
      %p34 = scmp.eq.s32.totalorder %s15, 0
      %p35 = por %p33, %p34
      %p36 = scmp.ne.s32.totalorder %s25, %s28
      %p37 = scmp.eq.s32.totalorder %s20, 1
      %p38 = por %p36, %p37
      %p39 = scmp.ne.s32.totalorder %s28, %s29
      %p40 = scmp.eq.s32.totalorder %s20, 0
      %p41 = por %p39, %p40
      %p42 = scmp.ne.s32.totalorder %s28, %s29
      %p43 = scmp.eq.s32.totalorder %s21, 1
      %p44 = por %p42, %p43
      %p46 = scmp.ne.s32.totalorder %s29, %s45
      %p47 = scmp.eq.s32.totalorder %s21, 0
      %p48 = por %p46, %p47
      %s50 = sadd.s32 %s49, 1
      %p53 = scmp.eq.s32.totalorder %s15, 1
      %p54 = scmp.ne.s32.totalorder %s49, %s51
      %p55 = scmp.eq.s32.totalorder %s15, 0
      %p56 = por %p54, %p55
      %p57 = scmp.ne.s32.totalorder %s49, %s51
      %p58 = scmp.eq.s32.totalorder %s20, 1
      %p59 = por %p57, %p58
      %p60 = scmp.ne.s32.totalorder %s51, %s52
      %p61 = scmp.eq.s32.totalorder %s20, 0
      %p62 = por %p60, %p61
      %p63 = scmp.ne.s32.totalorder %s51, %s52
      %p64 = scmp.eq.s32.totalorder %s21, 1
      %p65 = por %p63, %p64
      %p67 = scmp.ne.s32.totalorder %s52, %s66
      %p68 = scmp.eq.s32.totalorder %s21, 0
      %p69 = por %p67, %p68
      %s71 = sadd.s32 %s70, 1
      %p74 = scmp.eq.s32.totalorder %s15, 1
      %p75 = scmp.ne.s32.totalorder %s70, %s72
      %p76 = scmp.eq.s32.totalorder %s15, 0
      %p77 = por %p75, %p76
      %p78 = scmp.ne.s32.totalorder %s70, %s72
      %p79 = scmp.eq.s32.totalorder %s20, 1
      %p80 = por %p78, %p79
      %p81 = scmp.ne.s32.totalorder %s72, %s73
      %p82 = scmp.eq.s32.totalorder %s20, 0
      %p83 = por %p81, %p82
      %p84 = scmp.ne.s32.totalorder %s72, %s73
      %p85 = scmp.eq.s32.totalorder %s21, 1
      %p86 = por %p84, %p85
      %p88 = scmp.ne.s32.totalorder %s73, %s87
      %p89 = scmp.eq.s32.totalorder %s21, 0
      %p90 = por %p88, %p89
      %s91 = ssub.s32 %s15, %s22
      %p92 = scmp.eq.s32.totalorder %s91, 0
      %s94 = sadd.s32 %s93, 1
      %s95 = scalar_select %p92, %s93, %s94
      %p98 = pneg %p92
      %p99 = scmp.eq.s32.totalorder %s15, 1
      %p100 = por %p98, %p99
      %p101 = scmp.ne.s32.totalorder %s93, %s96
      %p102 = scmp.eq.s32.totalorder %s15, 0
      %p103 = por %p101, %p102
      %p104 = scmp.ne.s32.totalorder %s93, %s96
      %p105 = scmp.eq.s32.totalorder %s20, 1
      %p106 = por %p104, %p105
      %p107 = scmp.ne.s32.totalorder %s96, %s97
      %p108 = scmp.eq.s32.totalorder %s20, 0
      %p109 = por %p107, %p108
      %p110 = scmp.ne.s32.totalorder %s96, %s97
      %p111 = scmp.eq.s32.totalorder %s21, 1
      %p112 = por %p110, %p111
      %p114 = scmp.ne.s32.totalorder %s97, %s113
      %p115 = scmp.eq.s32.totalorder %s21, 0
      %p116 = por %p114, %p115
      %p117 = scmp.le.s32.totalorder 1, %s15
      %p118 = scmp.lt.s32.totalorder %s15, 3
      %p119 = pnand %p117, %p118
      %p120 = pneg %p119
      // Predicated region
      $region9: #{tpu_custom_call.1} parent=5 // pred_check
        _
      $region10: #{tpu_custom_call.1} parent=5 // pred_check_branch
        %122 = sbr.rel (%p119) target = $region12
      $region11: #{tpu_custom_call.1} parent=5 // pred_region
        %s123 = ssub.s32 %s15, 1
        // Predicated region
        $region13: #{tpu_custom_call.1} parent=11 // pred_check
          %p124 = pneg %p62
        $region14: #{tpu_custom_call.1} parent=11 // pred_check_branch
          %126 = sbr.rel (%p124) target = $region16
        $region15: #{tpu_custom_call.1} parent=11 // pred_region
          _
        $region16: #{tpu_custom_call.1} parent=11 // pred_fallthru
          _
        // Predicated region
        $region17: #{tpu_custom_call.1} parent=11 // pred_check
          %p127 = pneg %p83
        $region18: #{tpu_custom_call.1} parent=11 // pred_check_branch
          %129 = sbr.rel (%p127) target = $region20
        $region19: #{tpu_custom_call.1} parent=11 // pred_region
          _
        $region20: #{tpu_custom_call.1} parent=11 // pred_fallthru
          _
      $region12: #{tpu_custom_call.1} parent=5 // pred_fallthru
        _
      %p130 = scmp.lt.s32.totalorder %s15, 2
      // Predicated region
      $region21: #{tpu_custom_call.1} parent=5 // pred_check
        %p131 = pneg %p130
      $region22: #{tpu_custom_call.1} parent=5 // pred_check_branch
        %133 = sbr.rel (%p131) target = $region24
      $region23: #{tpu_custom_call.1} parent=5 // pred_region
        // Predicated region
        $region25: #{tpu_custom_call.1} parent=23 // pred_check
          %p134 = pneg %p35
        $region26: #{tpu_custom_call.1} parent=23 // pred_check_branch
          %136 = sbr.rel (%p134) target = $region28
        $region27: #{tpu_custom_call.1} parent=23 // pred_region
          %s137 = sand.u32 %s25, 1
          %s138 = scalar_lea.sflag [#allocation3], %s137
          %s139 = sand.u32 %s25, 1
          %s140 = smul.addr %s139, 32
          %s141 = scalar_lea.vmem [#allocation2], %s140
          %143 = vsyncadd %s138, 0
          %s144 = smul.addr %s15, 4
          %s145 = smul.addr %s144, 8
          %s146 = scalar_lea.hbm %s0, %s145
          %s148 = sshll.u32 %s146, 4
          %s149 = int_to_ptr.hbm [resolvable:$true] %s148
          %s150 = sshll.u32 %s141, 4
          %s151 = int_to_ptr.vmem [resolvable:$true] %s150
          %153 = dma.hbm_to_vmem [thread:$0]  %s149, 512, %s151, %s138
        $region28: #{tpu_custom_call.1} parent=23 // pred_fallthru
          _
      $region24: #{tpu_custom_call.1} parent=5 // pred_fallthru
        _
      %p154 = scmp.le.s32.totalorder 1, %s15
      %p155 = scmp.lt.s32.totalorder %s15, 3
      %p156 = pnand %p154, %p155
      %p157 = pneg %p156
      // Predicated region
      $region29: #{tpu_custom_call.1} parent=5 // pred_check
        _
      $region30: #{tpu_custom_call.1} parent=5 // pred_check_branch
        %159 = sbr.rel (%p156) target = $region32
      $region31: #{tpu_custom_call.1} parent=5 // pred_region
        %s160 = ssub.s32 %s15, 1
        %s161 = sand.u32 %s28, 1
        %s162 = scalar_lea.sflag [#allocation3], %s161
        %s163 = sand.u32 %s28, 1
        %s164 = smul.addr %s163, 32
        %s165 = scalar_lea.vmem [#allocation2], %s164
        // Predicated region
        $region33: #{tpu_custom_call.1} parent=31 // pred_check
          %p166 = pneg %p41
        $region34: #{tpu_custom_call.1} parent=31 // pred_check_branch
          %168 = sbr.rel (%p166) target = $region36
        $region35: #{tpu_custom_call.1} parent=31 // pred_region
          %170 = dma.done %s162, 512
        $region36: #{tpu_custom_call.1} parent=31 // pred_fallthru
          _
        %s171 = sand.u32 %s28, 1
        %s172 = scalar_lea.sflag [#allocation3], %s171
        %s173 = sand.u32 %s28, 1
        %s174 = smul.addr %s173, 32
        %s175 = scalar_lea.vmem [#allocation2], %s174
        %p176 = pneg %p41
        %p177 = pneg %p38
        %p178 = pneg %p62
        %p179 = pneg %p59
        %p180 = pneg %p83
        %p181 = pneg %p80
        %p182 = pneg %p109
        %p183 = pneg %p106
        %s184 = sand.u32 %s96, 1
        %s185 = scalar_lea.sflag [#allocation4], %s184
        %s186 = sand.u32 %s96, 1
        %s187 = smul.addr %s186, 24
        %s188 = scalar_lea.vmem [#allocation5], %s187
        %v189 = vld [vmem:[%s1] sm:$0xff]
        %v190 = vld [vmem:[%s2] sm:$0xff]
        %v191 = vld [vmem:[%s165] sm:$0xff]
        %v192 = vld [vmem:[%s165 + $0x8] sm:$0xff]
        %v193 = vld [vmem:[%s165 + $0x10] sm:$0xff]
        %v194 = vld [vmem:[%s165 + $0x18] sm:$0xff]
        %199 = vrot.lane.b32.xlu0 %v191, 127
        %v200 = vpop.permute.xlu0 %199
        %201 = vrot.lane.b32.xlu0 %v192, 127
        %v202 = vpop.permute.xlu0 %201
        %203 = vrot.lane.b32.xlu0 %v193, 127
        %v204 = vpop.permute.xlu0 %203
        %205 = vrot.lane.b32.xlu0 %v194, 127
        %v206 = vpop.permute.xlu0 %205
        %vm207 = vcmask 1039360
        %v208 = vsel %vm207, %v200, %v202
        %v209 = vsel %vm207, %v202, %v204
        %v210 = vsel %vm207, %v204, %v206
        %214 = vrot.lane.b32.xlu0 %v191, 126
        %v215 = vpop.permute.xlu0 %214
        %216 = vrot.lane.b32.xlu0 %v192, 126
        %v217 = vpop.permute.xlu0 %216
        %218 = vrot.lane.b32.xlu0 %v193, 126
        %v219 = vpop.permute.xlu0 %218
        %220 = vrot.lane.b32.xlu0 %v194, 126
        %v221 = vpop.permute.xlu0 %220
        %vm222 = vcmask 1031168
        %v223 = vsel %vm222, %v215, %v217
        %v224 = vsel %vm222, %v217, %v219
        %v225 = vsel %vm222, %v219, %v221
        %229 = vrot.lane.b32.xlu0 %v191, 110
        %v230 = vpop.permute.xlu0 %229
        %231 = vrot.lane.b32.xlu0 %v192, 110
        %v232 = vpop.permute.xlu0 %231
        %233 = vrot.lane.b32.xlu0 %v193, 110
        %v234 = vpop.permute.xlu0 %233
        %235 = vrot.lane.b32.xlu0 %v194, 110
        %v236 = vpop.permute.xlu0 %235
        %vm237 = vcmask 900096
        %v238 = vsel %vm237, %v230, %v232
        %v239 = vsel %vm237, %v232, %v234
        %v240 = vsel %vm237, %v234, %v236
        %244 = vrot.lane.b32.xlu0 %v191, 109
        %v245 = vpop.permute.xlu0 %244
        %246 = vrot.lane.b32.xlu0 %v192, 109
        %v247 = vpop.permute.xlu0 %246
        %248 = vrot.lane.b32.xlu0 %v193, 109
        %v249 = vpop.permute.xlu0 %248
        %250 = vrot.lane.b32.xlu0 %v194, 109
        %v251 = vpop.permute.xlu0 %250
        %vm252 = vcmask 891904
        %v253 = vsel %vm252, %v245, %v247
        %v254 = vsel %vm252, %v247, %v249
        %v255 = vsel %vm252, %v249, %v251
        %259 = vrot.lane.b32.xlu0 %v191, 108
        %v260 = vpop.permute.xlu0 %259
        %261 = vrot.lane.b32.xlu0 %v192, 108
        %v262 = vpop.permute.xlu0 %261
        %263 = vrot.lane.b32.xlu0 %v193, 108
        %v264 = vpop.permute.xlu0 %263
        %265 = vrot.lane.b32.xlu0 %v194, 108
        %v266 = vpop.permute.xlu0 %265
        %vm267 = vcmask 883712
        %v268 = vsel %vm267, %v260, %v262
        %v269 = vsel %vm267, %v262, %v264
        %v270 = vsel %vm267, %v264, %v266
        %274 = vrot.lane.b32.xlu0 %v191, 92
        %v275 = vpop.permute.xlu0 %274
        %276 = vrot.lane.b32.xlu0 %v192, 92
        %v277 = vpop.permute.xlu0 %276
        %278 = vrot.lane.b32.xlu0 %v193, 92
        %v279 = vpop.permute.xlu0 %278
        %280 = vrot.lane.b32.xlu0 %v194, 92
        %v281 = vpop.permute.xlu0 %280
        %vm282 = vcmask 752640
        %v283 = vsel %vm282, %v275, %v277
        %v284 = vsel %vm282, %v277, %v279
        %v285 = vsel %vm282, %v279, %v281
        %289 = vrot.lane.b32.xlu0 %v191, 91
        %v290 = vpop.permute.xlu0 %289
        %291 = vrot.lane.b32.xlu0 %v192, 91
        %v292 = vpop.permute.xlu0 %291
        %293 = vrot.lane.b32.xlu0 %v193, 91
        %v294 = vpop.permute.xlu0 %293
        %295 = vrot.lane.b32.xlu0 %v194, 91
        %v296 = vpop.permute.xlu0 %295
        %vm297 = vcmask 744448
        %v298 = vsel %vm297, %v290, %v292
        %v299 = vsel %vm297, %v292, %v294
        %v300 = vsel %vm297, %v294, %v296
        %304 = vrot.lane.b32.xlu0 %v191, 90
        %v305 = vpop.permute.xlu0 %304
        %306 = vrot.lane.b32.xlu0 %v192, 90
        %v307 = vpop.permute.xlu0 %306
        %308 = vrot.lane.b32.xlu0 %v193, 90
        %v309 = vpop.permute.xlu0 %308
        %310 = vrot.lane.b32.xlu0 %v194, 90
        %v311 = vpop.permute.xlu0 %310
        %vm312 = vcmask 736256
        %v313 = vsel %vm312, %v305, %v307
        %v314 = vsel %vm312, %v307, %v309
        %v315 = vsel %vm312, %v309, %v311
        %320 = vset.pattern.permute.xlu0 0
        %321 = vperm.xlu0 %320, %v190
        %v322 = vpop.permute.xlu0 %321
        %vm324 = vcmask 588800
        %v326 = vsel %vm324, %v189, 0
        %328 = vmatpush.msra.mxu0 0.0
        %329 = vmatpush.msra.mxu0 0.0
        %330 = vmatpush.msra.mxu0 0.0
        %331 = vmatpush.msra.mxu0 0.0
        %332 = vmatpush.msra.mxu0 0.0
        %333 = vmatpush.msra.mxu0 0.0
        %334 = vmatpush.msra.mxu0 0.0
        %335 = vmatpush.msra.mxu0 %v313
        %336 = vmatpush.msra.mxu0 %v298
        %337 = vmatpush.msra.mxu0 %v283
        %338 = vmatpush.msra.mxu0 %v268
        %339 = vmatpush.msra.mxu0 %v253
        %340 = vmatpush.msra.mxu0 %v238
        %341 = vmatpush.msra.mxu0 %v223
        %342 = vmatpush.msra.mxu0 %v208
        %343 = vmatpush.msra.mxu0 %v191
        %344 = vmatmul.f32.gmra.mxu0 %v326
        %v345 = vpop.f32.mrf.mxu0
        %v346 = vadd.f32 %v322, %v345
        %347 = vdwg.mxu0
        %348 = vmatpush.msra.mxu0 0.0
        %349 = vmatpush.msra.mxu0 0.0
        %350 = vmatpush.msra.mxu0 0.0
        %351 = vmatpush.msra.mxu0 0.0
        %352 = vmatpush.msra.mxu0 0.0
        %353 = vmatpush.msra.mxu0 0.0
        %354 = vmatpush.msra.mxu0 0.0
        %355 = vmatpush.msra.mxu0 %v314
        %356 = vmatpush.msra.mxu0 %v299
        %357 = vmatpush.msra.mxu0 %v284
        %358 = vmatpush.msra.mxu0 %v269
        %359 = vmatpush.msra.mxu0 %v254
        %360 = vmatpush.msra.mxu0 %v239
        %361 = vmatpush.msra.mxu0 %v224
        %362 = vmatpush.msra.mxu0 %v209
        %363 = vmatpush.msra.mxu0 %v192
        %364 = vmatmul.f32.gmra.mxu0 %v326
        %v365 = vpop.f32.mrf.mxu0
        %v366 = vadd.f32 %v322, %v365
        %367 = vdwg.mxu0
        %368 = vmatpush.msra.mxu0 0.0
        %369 = vmatpush.msra.mxu0 0.0
        %370 = vmatpush.msra.mxu0 0.0
        %371 = vmatpush.msra.mxu0 0.0
        %372 = vmatpush.msra.mxu0 0.0
        %373 = vmatpush.msra.mxu0 0.0
        %374 = vmatpush.msra.mxu0 0.0
        %375 = vmatpush.msra.mxu0 %v315
        %376 = vmatpush.msra.mxu0 %v300
        %377 = vmatpush.msra.mxu0 %v285
        %378 = vmatpush.msra.mxu0 %v270
        %379 = vmatpush.msra.mxu0 %v255
        %380 = vmatpush.msra.mxu0 %v240
        %381 = vmatpush.msra.mxu0 %v225
        %382 = vmatpush.msra.mxu0 %v210
        %383 = vmatpush.msra.mxu0 %v193
        %384 = vmatmul.f32.gmra.mxu0 %v326
        %v385 = vpop.f32.mrf.mxu0
        %v386 = vadd.f32 %v322, %v385
        %387 = vdwg.mxu0
        %v388 = vmax.f32 %v346, 0.0
        %v389 = vmax.f32 %v366, 0.0
        %v390 = vmax.f32 %v386, 0.0
        %391 = vst [vmem:[%s188] sm:$0xff] %v388
        %392 = vst [vmem:[%s188 + $0x8] sm:$0xff] %v389
        %393 = vst [vmem:[%s188 + $0x10] sm:$0xff] %v390
        %s394 = sand.u32 %s96, 1
        %s395 = scalar_lea.sflag [#allocation4], %s394
        %s396 = sand.u32 %s96, 1
        %s397 = smul.addr %s396, 24
        %s398 = scalar_lea.vmem [#allocation5], %s397
        // Predicated region
        $region37: #{tpu_custom_call.1} parent=31 // pred_check
          %p399 = pneg %p106
        $region38: #{tpu_custom_call.1} parent=31 // pred_check_branch
          %401 = sbr.rel (%p399) target = $region40
        $region39: #{tpu_custom_call.1} parent=31 // pred_region
          %403 = vsyncadd %s395, 0
          %s404 = smul.addr %s20, 3
          %s405 = smul.addr %s404, 8
          %s406 = scalar_lea.hbm %s3, %s405
          %s408 = sshll.u32 %s398, 4
          %s409 = int_to_ptr.vmem [resolvable:$true] %s408
          %s410 = sshll.u32 %s406, 4
          %s411 = int_to_ptr.hbm [resolvable:$true] %s410
          %413 = dma.vmem_to_hbm [thread:$0]  %s409, 384, %s411, %s395
        $region40: #{tpu_custom_call.1} parent=31 // pred_fallthru
          _
      $region32: #{tpu_custom_call.1} parent=5 // pred_fallthru
        _
      %p414 = scmp.le.s32.totalorder 2, %s15
      // Predicated region
      $region41: #{tpu_custom_call.1} parent=5 // pred_check
        %p415 = pneg %p414
      $region42: #{tpu_custom_call.1} parent=5 // pred_check_branch
        %417 = sbr.rel (%p415) target = $region44
      $region43: #{tpu_custom_call.1} parent=5 // pred_region
        %s418 = ssub.s32 %s15, 2
        // Predicated region
        $region45: #{tpu_custom_call.1} parent=43 // pred_check
          %p419 = pneg %p112
        $region46: #{tpu_custom_call.1} parent=43 // pred_check_branch
          %421 = sbr.rel (%p419) target = $region48
        $region47: #{tpu_custom_call.1} parent=43 // pred_region
          %s422 = sand.u32 %s97, 1
          %s423 = scalar_lea.sflag [#allocation4], %s422
          %s424 = sand.u32 %s97, 1
          %s425 = smul.addr %s424, 24
          %s426 = scalar_lea.vmem [#allocation5], %s425
          %428 = dma.done %s423, 384
        $region48: #{tpu_custom_call.1} parent=43 // pred_fallthru
          _
      $region44: #{tpu_custom_call.1} parent=5 // pred_fallthru
        _
    $region6: #{tpu_custom_call.1} parent=1 // loop_footer
      %s19 = sadd.s32 1, %s15
    $region7: #{tpu_custom_call.1} parent=1 // loop_footer_branch
      %14 = sbr.rel target = $region3
    $region8: #{tpu_custom_call.1} parent=1 // loop_exit
      _
    %429 = vsyncpa [#allocation3], 1
    %s430 = scalar_lea.sflag [#allocation3], 1
    %431 = vsyncpa %s430, 1
    %432 = vsyncpa [#allocation4], 1
    %s433 = scalar_lea.sflag [#allocation4], 1
    %434 = vsyncpa %s433, 1

</llo_original>
